<compile_context>
chip_gen: v5e
topology: v5e:2x2
jax: 0.10.0
libtpu: 0.0.40
codegen_flags: <defaults>
</compile_context>

<pallas_src>
import numpy as np
import jax
import jax.numpy as jnp
from jax.experimental import pallas as pl
from jax.experimental.pallas import tpu as pltpu

UNDO = [4, 12, 20, 28, 5, 13, 21, 29, 6, 14, 22, 30, 7, 15, 23, 31,
        24, 25, 26, 27, 16, 17, 18, 19, 8, 9, 10, 11, 0, 1, 2, 3,
        59, 51, 43, 35, 58, 50, 42, 34, 57, 49, 41, 33, 56, 48, 40, 32]

N_IN = 17          # input features
N_HID = 128        # hidden features
N_OUT = len(UNDO)  # 48 real outputs


# ----------------------------------------------------------------------------
# Pallas kernel: Linear + ReLU + (conv-transpose folded to matmul) + ReLU.
# ----------------------------------------------------------------------------
def _decoder_kernel(x_ref, w1_ref, b1_ref, m_ref, b2_ref, o_ref):
    # f32 operands, f32 MXU accumulation (kernel is HBM-bound; f32 is free).
    h = jnp.dot(x_ref[...], w1_ref[...], preferred_element_type=jnp.float32)
    h = jnp.maximum(h + b1_ref[...], 0.0)
    y = jnp.dot(h, m_ref[...], preferred_element_type=jnp.float32)
    y = jnp.maximum(y + b2_ref[...], 0.0)
    o_ref[...] = y.astype(o_ref.dtype)


def _pick_blk_b(B, blk_b_target, min_grid_steps):
    """Batch-tile rows: big enough to amortize per-step overhead, small enough
    to stay in v7x VMEM and to give its two TensorCores >= min_grid_steps."""
    if B <= 1024:
        return B                                   # single step; block == array
    per_step = pl.cdiv(B, min_grid_steps)
    per_step = ((per_step + 7) // 8) * 8           # sublane-align
    return int(min(blk_b_target, max(per_step, 256)))


def cae_conv_decoder_pallas(x, w1, b1, m, b2, *, blk_b_target=8192,
                            min_grid_steps=8):
    """x: (B, 17) f32.  Returns (B, 48) f32."""
    B = x.shape[0]
    blk_b = _pick_blk_b(B, blk_b_target, min_grid_steps)
    grid = (pl.cdiv(B, blk_b),)

    param_bytes = (N_IN * N_HID + N_HID * N_OUT + N_HID + N_OUT) * 4
    cost = pl.CostEstimate(
        flops=2 * B * (N_IN * N_HID + N_HID * N_OUT),
        transcendentals=0,
        bytes_accessed=B * (N_IN + N_OUT) * 4 + param_bytes,
    )

    return pl.pallas_call(
        _decoder_kernel,
        out_shape=jax.ShapeDtypeStruct((B, N_OUT), jnp.float32),
        grid=grid,
        in_specs=[
            pl.BlockSpec((blk_b, N_IN), lambda i: (i, 0)),        # x tile
            pl.BlockSpec((N_IN, N_HID), lambda i: (0, 0)),        # W1 (resident)
            pl.BlockSpec((1, N_HID), lambda i: (0, 0)),           # b1 (resident)
            pl.BlockSpec((N_HID, N_OUT), lambda i: (0, 0)),       # M  (resident)
            pl.BlockSpec((1, N_OUT), lambda i: (0, 0)),           # b2 (resident)
        ],
        out_specs=pl.BlockSpec((blk_b, N_OUT), lambda i: (i, 0)),
        compiler_params=pltpu.CompilerParams(
            dimension_semantics=("parallel",),    # shard batch over v7x's 2 TCs
            vmem_limit_bytes=48 * 1024 * 1024,    # safe on v7x 64 MiB, ample on v5e/v6e
        ),
        cost_estimate=cost,
    )(x, w1, b1, m, b2)


# ----------------------------------------------------------------------------
# Parameter setup (deterministic, mimics the module's __init__ shapes).
# ----------------------------------------------------------------------------
def init_params(key):
    k1, k2, k3, k4 = jax.random.split(key, 4)
    # Linear(17, 128): PyTorch weight (128, 17); stored transposed (17, 128).
    lim1 = 1.0 / np.sqrt(float(N_IN))
    w1 = jax.random.uniform(k1, (N_IN, N_HID), jnp.float32, -lim1, lim1)
    b1 = jax.random.uniform(k2, (1, N_HID), jnp.float32, -lim1, lim1)
    # ConvTranspose2d(8, 1, 2, stride=2): weight (in=8, out=1, 2, 2), bias (1,)
    lim2 = 1.0 / np.sqrt(8.0 * 2.0 * 2.0)
    w_conv = jax.random.uniform(k3, (8, 2, 2), jnp.float32, -lim2, lim2)
    b_conv = jax.random.uniform(k4, (1,), jnp.float32, -lim2, lim2)
    return w1, b1, w_conv, b_conv


def build_conv_matrix(w_conv_np):
    """Fold stride-2/k=2 ConvTranspose2d + NCHW flatten + undo into (128, 48)."""
    M = np.zeros((N_HID, 64), dtype=np.float32)
    for c in range(8):
        for i in range(4):
            for j in range(4):
                row = c * 16 + i * 4 + j                          # hidden index
                for ki in range(2):
                    for kj in range(2):
                        col = 8 * (2 * i + ki) + (2 * j + kj)     # NCHW flatten
                        M[row, col] = w_conv_np[c, ki, kj]
    return M[:, UNDO]                                             # (128, 48)


# ----------------------------------------------------------------------------
# Pure-JAX reference (explicit conv-transpose assembly) for validation.
# ----------------------------------------------------------------------------
def reference(x, w1, b1, w_conv, b_conv):
    B = x.shape[0]
    h = jnp.maximum(x @ w1 + b1, 0.0).reshape(B, 8, 4, 4)
    y = jnp.einsum('bcij,ckl->bikjl', h, w_conv)                  # (B,4,2,4,2)
    y = y.reshape(B, 8, 8) + b_conv[0]
    y = jnp.maximum(y, 0.0).reshape(B, 64)
    return y[:, jnp.asarray(UNDO)]


if __name__ == "__main__":
    key = jax.random.PRNGKey(0)
    kx, kp = jax.random.split(key)

    B = 2
    x = jax.random.normal(kx, (B, N_IN), dtype=jnp.float32)

    w1, b1, w_conv, b_conv = init_params(kp)
    m = jnp.asarray(build_conv_matrix(np.asarray(w_conv)))        # (128, 48)
    b2 = jnp.full((1, N_OUT), float(np.asarray(b_conv)[0]), dtype=jnp.float32)

    fwd = jax.jit(cae_conv_decoder_pallas)
    out = jax.block_until_ready(fwd(x, w1, b1, m, b2))

    ref = jax.block_until_ready(reference(x, w1, b1, w_conv, b_conv))
    # Full-f32 pipeline -> tight tolerance against the f32 reference.
    if not np.allclose(np.asarray(out), np.asarray(ref), rtol=1e-5, atol=1e-5):
        raise AssertionError("Pallas kernel does not match reference")

    print("KERNEL_OK")
</pallas_src>

<mosaic_0001>
module attributes {stable_mosaic.version = 11 : i64} {
  func.func @_decoder_kernel(%arg0: i32, %arg1: memref<2x17xf32, #tpu.memory_space<vmem>>, %arg2: memref<17x128xf32, #tpu.memory_space<vmem>>, %arg3: memref<1x128xf32, #tpu.memory_space<vmem>>, %arg4: memref<128x48xf32, #tpu.memory_space<vmem>>, %arg5: memref<1x48xf32, #tpu.memory_space<vmem>>, %arg6: memref<2x48xf32, #tpu.memory_space<vmem>>) attributes {dimension_semantics = [#tpu.dimension_semantics<parallel>], iteration_bounds = array<i64: 1>, scalar_prefetch = 0 : i64, scratch_operands = 0 : i64, tpu.core_type = #tpu.core_type<tc>, window_params = [{transform_indices = @transform_0, window_bounds = array<i64: 2, 17>}, {pipeline_mode = #tpu.pipeline_mode<synchronous>, transform_indices = @transform_1, window_bounds = array<i64: 17, 128>}, {pipeline_mode = #tpu.pipeline_mode<synchronous>, transform_indices = @transform_2, window_bounds = array<i64: 1, 128>}, {pipeline_mode = #tpu.pipeline_mode<synchronous>, transform_indices = @transform_3, window_bounds = array<i64: 128, 48>}, {pipeline_mode = #tpu.pipeline_mode<synchronous>, transform_indices = @transform_4, window_bounds = array<i64: 1, 48>}, {transform_indices = @transform_5, window_bounds = array<i64: 2, 48>}]} {
    %c0 = arith.constant 0 : index
    %c0_0 = arith.constant 0 : index
    %0 = vector.load %arg1[%c0, %c0_0] : memref<2x17xf32, #tpu.memory_space<vmem>>, vector<2x17xf32>
    %c0_1 = arith.constant 0 : index
    %c0_2 = arith.constant 0 : index
    %1 = vector.load %arg2[%c0_1, %c0_2] : memref<17x128xf32, #tpu.memory_space<vmem>>, vector<17x128xf32>
    %cst = arith.constant dense<0.000000e+00> : vector<2x128xf32>
    %2 = tpu.matmul %0, %1, %cst {dimension_numbers = #tpu.dot_dimension_numbers<[1], [0], [0], [1], [0, 0, 1, 1], [], []>} : vector<2x17xf32>, vector<17x128xf32>, vector<2x128xf32> -> vector<2x128xf32>
    %c0_3 = arith.constant 0 : index
    %c0_4 = arith.constant 0 : index
    %3 = vector.load %arg3[%c0_3, %c0_4] : memref<1x128xf32, #tpu.memory_space<vmem>>, vector<1x128xf32>
    %4 = vector.broadcast %3 : vector<1x128xf32> to vector<2x128xf32>
    %5 = arith.addf %2, %4 : vector<2x128xf32>
    %cst_5 = arith.constant 0.000000e+00 : f32
    %6 = vector.broadcast %cst_5 : f32 to vector<2x128xf32>
    %7 = arith.maximumf %5, %6 : vector<2x128xf32>
    %c0_6 = arith.constant 0 : index
    %c0_7 = arith.constant 0 : index
    %8 = vector.load %arg4[%c0_6, %c0_7] : memref<128x48xf32, #tpu.memory_space<vmem>>, vector<128x48xf32>
    %cst_8 = arith.constant dense<0.000000e+00> : vector<2x48xf32>
    %9 = tpu.matmul %7, %8, %cst_8 {dimension_numbers = #tpu.dot_dimension_numbers<[1], [0], [0], [1], [0, 0, 1, 1], [], []>} : vector<2x128xf32>, vector<128x48xf32>, vector<2x48xf32> -> vector<2x48xf32>
    %c0_9 = arith.constant 0 : index
    %c0_10 = arith.constant 0 : index
    %10 = vector.load %arg5[%c0_9, %c0_10] : memref<1x48xf32, #tpu.memory_space<vmem>>, vector<1x48xf32>
    %11 = vector.broadcast %10 : vector<1x48xf32> to vector<2x48xf32>
    %12 = arith.addf %9, %11 : vector<2x48xf32>
    %cst_11 = arith.constant 0.000000e+00 : f32
    %13 = vector.broadcast %cst_11 : f32 to vector<2x48xf32>
    %14 = arith.maximumf %12, %13 : vector<2x48xf32>
    %c0_12 = arith.constant 0 : index
    %c0_13 = arith.constant 0 : index
    %15 = vector.load %arg6[%c0_12, %c0_13] : memref<2x48xf32, #tpu.memory_space<vmem>>, vector<2x48xf32>
    tpu.vector_store %arg6[%c0_12, %c0_13], %14 {strides = array<i32>} : memref<2x48xf32, #tpu.memory_space<vmem>>, vector<2x48xf32>,
    return
  }
  func.func @transform_0(%arg0: i32) -> (i32, i32) {
    %c0_i32 = arith.constant 0 : i32
    %c0_i32_0 = arith.constant 0 : i32
    return %arg0, %c0_i32 : i32, i32
  }
  func.func @transform_1(%arg0: i32) -> (i32, i32) {
    %c0_i32 = arith.constant 0 : i32
    %c0_i32_0 = arith.constant 0 : i32
    %c0_i32_1 = arith.constant 0 : i32
    return %c0_i32, %c0_i32_0 : i32, i32
  }
  func.func @transform_2(%arg0: i32) -> (i32, i32) {
    %c0_i32 = arith.constant 0 : i32
    %c0_i32_0 = arith.constant 0 : i32
    %c0_i32_1 = arith.constant 0 : i32
    return %c0_i32, %c0_i32_0 : i32, i32
  }
  func.func @transform_3(%arg0: i32) -> (i32, i32) {
    %c0_i32 = arith.constant 0 : i32
    %c0_i32_0 = arith.constant 0 : i32
    %c0_i32_1 = arith.constant 0 : i32
    return %c0_i32, %c0_i32_0 : i32, i32
  }
  func.func @transform_4(%arg0: i32) -> (i32, i32) {
    %c0_i32 = arith.constant 0 : i32
    %c0_i32_0 = arith.constant 0 : i32
    %c0_i32_1 = arith.constant 0 : i32
    return %c0_i32, %c0_i32_0 : i32, i32
  }
  func.func @transform_5(%arg0: i32) -> (i32, i32) {
    %c0_i32 = arith.constant 0 : i32
    %c0_i32_0 = arith.constant 0 : i32
    return %arg0, %c0_i32 : i32, i32
  }
}

</mosaic_0001>

<llo_original>
// kernel: cae_conv_decoder_pallas.1
$region0: #{cae_conv_decoder_pallas.1}
  #allocation0 [shape = 'u32[]', space=smem, size = 0x4, offset = 0x4, fixed_abs, tag = 'smem constant byte address 0x4 - core index']
  #allocation1 [shape = 'u32[72,128]{1,0:T(1,128)}', space=vmem, size = 0x9000, scoped, tag = 'internal scratch']
  %s0 = inlined_call_operand.vmem [shape: f32[2,17], index: 0, kind: input, shape index: {}]
  %s1 = inlined_call_operand.vmem [shape: f32[17,128], index: 1, kind: input, shape index: {}]
  %s2 = inlined_call_operand.vmem [shape: f32[1,128], index: 2, kind: input, shape index: {}]
  %s3 = inlined_call_operand.vmem [shape: f32[128,48], index: 3, kind: input, shape index: {}]
  %s4 = inlined_call_operand.vmem [shape: f32[1,48], index: 4, kind: input, shape index: {}]
  %s5 = inlined_call_operand.hbm [shape: f32[2,48], index: 5, kind: output, shape index: {}]
  %s6 = sld [smem:[#allocation0]]
  $region30: #{cae_conv_decoder_pallas.1} parent=0
    _
  %s8 = ssub.s32 1, %s6
  %s9 = scalar_select 0, %s8, %s6
  $region1: #{cae_conv_decoder_pallas.1} parent=0
    #allocation2 [shape = 'u8[1024]{0}', space=vmem, size = 0x400, scoped, tag = 'output window, operand 0, single buffered']
    #allocation3 [shape = 's32[1]{0}', space=sflag, size = 0x4, scoped, tag = 'scoped memory for cae_conv_decoder_pallas.1']
    %10 = vsyncpa [#allocation3], 0
    // Predicated region
    $region2: #{cae_conv_decoder_pallas.1} parent=1 // pred_check
      _
    $region3: #{cae_conv_decoder_pallas.1} parent=1 // pred_check_branch
      %12 = sbr.rel (0) target = $region5
    $region4: #{cae_conv_decoder_pallas.1} parent=1 // pred_region
      _
    $region5: #{cae_conv_decoder_pallas.1} parent=1 // pred_fallthru
      _
    // Predicated region
    $region6: #{cae_conv_decoder_pallas.1} parent=1 // pred_check
      _
    $region7: #{cae_conv_decoder_pallas.1} parent=1 // pred_check_branch
      %14 = sbr.rel (0) target = $region9
    $region8: #{cae_conv_decoder_pallas.1} parent=1 // pred_region
      _
    $region9: #{cae_conv_decoder_pallas.1} parent=1 // pred_fallthru
      _
    // Predicated region
    $region10: #{cae_conv_decoder_pallas.1} parent=1 // pred_check
      _
    $region11: #{cae_conv_decoder_pallas.1} parent=1 // pred_check_branch
      %16 = sbr.rel (0) target = $region13
    $region12: #{cae_conv_decoder_pallas.1} parent=1 // pred_region
      _
    $region13: #{cae_conv_decoder_pallas.1} parent=1 // pred_fallthru
      _
    // Predicated region
    $region14: #{cae_conv_decoder_pallas.1} parent=1 // pred_check
      _
    $region15: #{cae_conv_decoder_pallas.1} parent=1 // pred_check_branch
      %18 = sbr.rel (0) target = $region17
    $region16: #{cae_conv_decoder_pallas.1} parent=1 // pred_region
      _
    $region17: #{cae_conv_decoder_pallas.1} parent=1 // pred_fallthru
      _
    // Predicated region
    $region18: #{cae_conv_decoder_pallas.1} parent=1 // pred_check
      _
    $region19: #{cae_conv_decoder_pallas.1} parent=1 // pred_check_branch
      %20 = sbr.rel (0) target = $region21
    $region20: #{cae_conv_decoder_pallas.1} parent=1 // pred_region
      _
    $region21: #{cae_conv_decoder_pallas.1} parent=1 // pred_fallthru
      _
    %v21 = vld [vmem:[%s0] sm:$0x3]
    %v22 = vld [vmem:[%s1] sm:$0xff]
    %v23 = vld [vmem:[%s1 + $0x8] sm:$0xff]
    %v24 = vld [vmem:[%s1 + $0x10] sm:$0x1]
    %v25 = vld [vmem:[%s2] sm:$0x1]
    %v27 = vperm.slane %v25, 0
    %vm29 = vcmask 138240
    %v31 = vsel %vm29, %v21, 0
    %vm33 = vcmask 1040384
    %v35 = vsel %vm33, %v24, 0
    %37 = vmatpush.msra.mxu0 0.0
    %38 = vmatpush.msra.mxu0 0.0
    %39 = vmatpush.msra.mxu0 0.0
    %40 = vmatpush.msra.mxu0 0.0
    %41 = vmatpush.msra.mxu0 0.0
    %42 = vmatpush.msra.mxu0 0.0
    %43 = vmatpush.msra.mxu0 0.0
    %44 = vmatpush.msra.mxu0 0.0
    %45 = vmatpush.msra.mxu0 0.0
    %46 = vmatpush.msra.mxu0 0.0
    %47 = vmatpush.msra.mxu0 0.0
    %48 = vmatpush.msra.mxu0 0.0
    %49 = vmatpush.msra.mxu0 0.0
    %50 = vmatpush.msra.mxu0 %v35
    %51 = vmatpush.msra.mxu0 %v23
    %52 = vmatpush.msra.mxu0 %v22
    %53 = vmatmul.f32.gmra.mxu0 %v31
    %v54 = vpop.f32.mrf.mxu0
    %v55 = vadd.f32 %v27, %v54
    %56 = vdwg.mxu0
    %v57 = vmax.f32 %v55, 0.0
    %v58 = vld [vmem:[%s3] sm:$0xff]
    %v59 = vld [vmem:[%s3 + $0x8] sm:$0xff]
    %v60 = vld [vmem:[%s3 + $0x10] sm:$0xff]
    %v61 = vld [vmem:[%s3 + $0x18] sm:$0xff]
    %v62 = vld [vmem:[%s3 + $0x20] sm:$0xff]
    %v63 = vld [vmem:[%s3 + $0x28] sm:$0xff]
    %v64 = vld [vmem:[%s3 + $0x30] sm:$0xff]
    %v65 = vld [vmem:[%s3 + $0x38] sm:$0xff]
    %v66 = vld [vmem:[%s3 + $0x40] sm:$0xff]
    %v67 = vld [vmem:[%s3 + $0x48] sm:$0xff]
    %v68 = vld [vmem:[%s3 + $0x50] sm:$0xff]
    %v69 = vld [vmem:[%s3 + $0x58] sm:$0xff]
    %v70 = vld [vmem:[%s3 + $0x60] sm:$0xff]
    %v71 = vld [vmem:[%s3 + $0x68] sm:$0xff]
    %v72 = vld [vmem:[%s3 + $0x70] sm:$0xff]
    %v73 = vld [vmem:[%s3 + $0x78] sm:$0xff]
    %v74 = vld [vmem:[%s4] sm:$0x1]
    %v76 = vperm.slane %v74, 0
    %78 = vmatpush.msra.mxu0 %v73
    %79 = vmatpush.msra.mxu0 %v72
    %80 = vmatpush.msra.mxu0 %v71
    %81 = vmatpush.msra.mxu0 %v70
    %82 = vmatpush.msra.mxu0 %v69
    %83 = vmatpush.msra.mxu0 %v68
    %84 = vmatpush.msra.mxu0 %v67
    %85 = vmatpush.msra.mxu0 %v66
    %86 = vmatpush.msra.mxu0 %v65
    %87 = vmatpush.msra.mxu0 %v64
    %88 = vmatpush.msra.mxu0 %v63
    %89 = vmatpush.msra.mxu0 %v62
    %90 = vmatpush.msra.mxu0 %v61
    %91 = vmatpush.msra.mxu0 %v60
    %92 = vmatpush.msra.mxu0 %v59
    %93 = vmatpush.msra.mxu0 %v58
    %94 = vmatmul.f32.gmra.mxu0 %v57
    %v95 = vpop.f32.mrf.mxu0
    %v96 = vadd.f32 %v76, %v95
    %97 = vdwg.mxu0
    %v98 = vmax.f32 %v96, 0.0
    %vm99 = vcmask 386048
    %100 = vst.msk [vmem:[#allocation2] sm:$0x3] %vm99, %v98
    // Predicated region
    $region22: #{cae_conv_decoder_pallas.1} parent=1 // pred_check
      _
    $region23: #{cae_conv_decoder_pallas.1} parent=1 // pred_check_branch
      %102 = sbr.rel (0) target = $region25
    $region24: #{cae_conv_decoder_pallas.1} parent=1 // pred_region
      %104 = vsyncadd [#allocation3], 0
      %s106 = sshll.u32 [#allocation2], 4
      %s107 = int_to_ptr.vmem [resolvable:$true] %s106
      %s108 = sshll.u32 %s5, 4
      %s109 = int_to_ptr.hbm [resolvable:$true] %s108
      %111 = dma.vmem_to_hbm [thread:$0]  %s107, 32, %s109, [#allocation3]
    $region25: #{cae_conv_decoder_pallas.1} parent=1 // pred_fallthru
      _
    // Predicated region
    $region26: #{cae_conv_decoder_pallas.1} parent=1 // pred_check
      _
    $region27: #{cae_conv_decoder_pallas.1} parent=1 // pred_check_branch
      %113 = sbr.rel (0) target = $region29
    $region28: #{cae_conv_decoder_pallas.1} parent=1 // pred_region
      %115 = dma.done [#allocation3], 32
    $region29: #{cae_conv_decoder_pallas.1} parent=1 // pred_fallthru
      _
    %116 = vsyncpa [#allocation3], 1

</llo_original>
